<compile_context>
chip_gen: v6e
topology: v6e:2x2x1
jax: 0.10.0
libtpu: 0.0.40
codegen_flags: <defaults>
</compile_context>

<pallas_src>
import functools

import jax
import jax.numpy as jnp
from jax.experimental import pallas as pl
from jax.experimental.pallas import tpu as pltpu

IN_FEATURES = 32   # features.shape[1] in the original script (synthetic choice)
H1, H2, OUT = 50, 25, 2


def _round_up(n: int, m: int) -> int:
    return ((n + m - 1) // m) * m


def classifier_kernel(x_ref, w1_ref, b1_ref, w2_ref, b2_ref, w3d_ref, b3d_ref, o_ref):
    # x_ref: (TB, F) bf16 streamed tile; weights resident in VMEM (constant block idx).
    x = x_ref[...]

    # Layer 1: Linear + ReLU (bf16 operands on MXU, f32 accumulate, f32 epilogue).
    h1 = jnp.dot(x, w1_ref[...], preferred_element_type=jnp.float32) + b1_ref[...]
    h1 = jnp.maximum(h1, 0.0)                              # (TB, 50) f32

    # Layer 2: Linear + ReLU (tiny K; keep f32, VPU epilogue in f32 for v5e).
    h2 = jnp.dot(h1, w2_ref[...], preferred_element_type=jnp.float32) + b2_ref[...]
    h2 = jnp.maximum(h2, 0.0)                              # (TB, 25) f32

    # Layer 3 + Softmax(dim=1) over 2 classes == sigmoid of the logit difference.
    # Contract w3d (1, 25) with h2 (TB, 25) over the 25-dim so the MXU directly
    # produces a lane-dense (1, TB) row: no 2-wide cross-lane reductions, no transpose.
    z = jax.lax.dot_general(
        w3d_ref[...], h2,
        dimension_numbers=(((1,), (1,)), ((), ())),
        preferred_element_type=jnp.float32,
    ) + b3d_ref[...]                                       # (1, TB) f32
    p0 = jax.nn.sigmoid(z)                                 # EUP slot
    o_ref[...] = jnp.concatenate([p0, 1.0 - p0], axis=0).astype(o_ref.dtype)  # (2, TB)


@functools.partial(jax.jit, static_argnames=("block_rows",))
def classifier_forward(x, w1, b1, w2, b2, w3, b3, *, block_rows=8192):
    B, F = x.shape
    assert F == IN_FEATURES

    # Fold the 2-class softmax into one logit-difference column:
    #   softmax([l0, l1]) == [sigmoid(l0 - l1), 1 - sigmoid(l0 - l1)]
    w3d = (w3[:, 0] - w3[:, 1]).reshape(1, H2)             # (1, 25)
    b3d = (b3[:, 0] - b3[:, 1]).reshape(1, 1)              # (1, 1)

    # bf16 on the dominant HBM stream (and matching first-layer weight); f32 accumulate.
    x_bf = x.astype(jnp.bfloat16)
    w1_bf = w1.astype(jnp.bfloat16)

    # Batch tile: multiple of 512 (covers v5e 128-row and v6e/v7x 256-row MXU
    # granularity, keeps the transposed output lane-dense), capped so double-buffered
    # tiles + f32 intermediates stay at a few MiB -- comfortably under the 16/32 MiB
    # default scoped VMEM and v7x's 64 MiB physical VMEM.
    TB = min(block_rows, _round_up(B, 512))
    B_pad = _round_up(B, TB)
    if B_pad != B:
        x_bf = jnp.pad(x_bf, ((0, B_pad - B), (0, 0)))

    full = lambda shape: pl.BlockSpec(shape, lambda i: (0, 0))   # resident operand

    out_t = pl.pallas_call(
        classifier_kernel,
        out_shape=jax.ShapeDtypeStruct((OUT, B_pad), jnp.float32),
        grid=(B_pad // TB,),
        in_specs=[
            pl.BlockSpec((TB, IN_FEATURES), lambda i: (i, 0)),   # streamed x tiles
            full((IN_FEATURES, H1)), full((1, H1)),
            full((H1, H2)), full((1, H2)),
            full((1, H2)), full((1, 1)),
        ],
        out_specs=pl.BlockSpec((OUT, TB), lambda i: (0, i)),     # lane-dense (2, TB)
        compiler_params=pltpu.CompilerParams(
            dimension_semantics=("parallel",),                   # megacore on v7x
        ),
    )(x_bf, w1_bf, b1, w2, b2, w3d, b3d)

    return out_t.T[:B]                                           # (B, 2)


def init_params(key):
    # Deterministic init mimicking nn.Linear's U(-1/sqrt(fan_in), 1/sqrt(fan_in)).
    ks = jax.random.split(key, 6)

    def linear(kw, kb, fan_in, fan_out):
        bound = 1.0 / jnp.sqrt(jnp.float32(fan_in))
        w = jax.random.uniform(kw, (fan_in, fan_out), jnp.float32, -bound, bound)
        b = jax.random.uniform(kb, (1, fan_out), jnp.float32, -bound, bound)
        return w, b

    w1, b1 = linear(ks[0], ks[1], IN_FEATURES, H1)
    w2, b2 = linear(ks[2], ks[3], H1, H2)
    w3, b3 = linear(ks[4], ks[5], H2, OUT)
    return w1, b1, w2, b2, w3, b3


def reference_forward(x, w1, b1, w2, b2, w3, b3):
    # Pure-JAX reference with the same bf16 cast on the x stream / first weight.
    hi = jax.lax.Precision.HIGHEST
    xb = x.astype(jnp.bfloat16).astype(jnp.float32)
    w1b = w1.astype(jnp.bfloat16).astype(jnp.float32)
    h1 = jnp.maximum(jnp.dot(xb, w1b, precision=hi) + b1, 0.0)
    h2 = jnp.maximum(jnp.dot(h1, w2, precision=hi) + b2, 0.0)
    return jax.nn.softmax(jnp.dot(h2, w3, precision=hi) + b3, axis=1)


if __name__ == "__main__":
    key = jax.random.PRNGKey(0)
    kx, kp = jax.random.split(key)

    batch = 8
    x = jax.random.normal(kx, (batch, IN_FEATURES), jnp.float32)
    params = init_params(kp)

    out = classifier_forward(x, *params)
    out = jax.block_until_ready(out)

    ref = reference_forward(x, *params)
    assert out.shape == (batch, OUT)
    assert jnp.allclose(out, ref, atol=5e-4, rtol=1e-3), "mismatch vs reference"
    assert jnp.allclose(jnp.sum(out, axis=1), 1.0, atol=1e-5), "softmax rows must sum to 1"

    print("KERNEL_OK")
</pallas_src>

<mosaic_0001>
module attributes {stable_mosaic.version = 11 : i64} {
  func.func @classifier_kernel(%arg0: i32, %arg1: memref<512x32xbf16, #tpu.memory_space<vmem>>, %arg2: memref<32x50xbf16, #tpu.memory_space<vmem>>, %arg3: memref<1x50xf32, #tpu.memory_space<vmem>>, %arg4: memref<50x25xf32, #tpu.memory_space<vmem>>, %arg5: memref<1x25xf32, #tpu.memory_space<vmem>>, %arg6: memref<1x25xf32, #tpu.memory_space<vmem>>, %arg7: memref<1x1xf32, #tpu.memory_space<vmem>>, %arg8: memref<2x512xf32, #tpu.memory_space<vmem>>) attributes {dimension_semantics = [#tpu.dimension_semantics<parallel>], iteration_bounds = array<i64: 1>, scalar_prefetch = 0 : i64, scratch_operands = 0 : i64, tpu.core_type = #tpu.core_type<tc>, window_params = [{transform_indices = @transform_0, window_bounds = array<i64: 512, 32>}, {pipeline_mode = #tpu.pipeline_mode<synchronous>, transform_indices = @transform_1, window_bounds = array<i64: 32, 50>}, {pipeline_mode = #tpu.pipeline_mode<synchronous>, transform_indices = @transform_2, window_bounds = array<i64: 1, 50>}, {pipeline_mode = #tpu.pipeline_mode<synchronous>, transform_indices = @transform_3, window_bounds = array<i64: 50, 25>}, {pipeline_mode = #tpu.pipeline_mode<synchronous>, transform_indices = @transform_4, window_bounds = array<i64: 1, 25>}, {pipeline_mode = #tpu.pipeline_mode<synchronous>, transform_indices = @transform_5, window_bounds = array<i64: 1, 25>}, {pipeline_mode = #tpu.pipeline_mode<synchronous>, transform_indices = @transform_6, window_bounds = array<i64: 1, 1>}, {transform_indices = @transform_7, window_bounds = array<i64: 2, 512>}]} {
    %c0 = arith.constant 0 : index
    %c0_0 = arith.constant 0 : index
    %0 = vector.load %arg1[%c0, %c0_0] : memref<512x32xbf16, #tpu.memory_space<vmem>>, vector<512x32xbf16>
    %c0_1 = arith.constant 0 : index
    %c0_2 = arith.constant 0 : index
    %1 = vector.load %arg2[%c0_1, %c0_2] : memref<32x50xbf16, #tpu.memory_space<vmem>>, vector<32x50xbf16>
    %cst = arith.constant dense<0.000000e+00> : vector<512x50xf32>
    %2 = tpu.matmul %0, %1, %cst {dimension_numbers = #tpu.dot_dimension_numbers<[1], [0], [0], [1], [0, 0, 1, 1], [], []>} : vector<512x32xbf16>, vector<32x50xbf16>, vector<512x50xf32> -> vector<512x50xf32>
    %c0_3 = arith.constant 0 : index
    %c0_4 = arith.constant 0 : index
    %3 = vector.load %arg3[%c0_3, %c0_4] : memref<1x50xf32, #tpu.memory_space<vmem>>, vector<1x50xf32>
    %4 = vector.broadcast %3 : vector<1x50xf32> to vector<512x50xf32>
    %5 = arith.addf %2, %4 : vector<512x50xf32>
    %cst_5 = arith.constant 0.000000e+00 : f32
    %6 = vector.broadcast %cst_5 : f32 to vector<512x50xf32>
    %7 = arith.maximumf %5, %6 : vector<512x50xf32>
    %c0_6 = arith.constant 0 : index
    %c0_7 = arith.constant 0 : index
    %8 = vector.load %arg4[%c0_6, %c0_7] : memref<50x25xf32, #tpu.memory_space<vmem>>, vector<50x25xf32>
    %cst_8 = arith.constant dense<0.000000e+00> : vector<512x25xf32>
    %9 = tpu.matmul %7, %8, %cst_8 {dimension_numbers = #tpu.dot_dimension_numbers<[1], [0], [0], [1], [0, 0, 1, 1], [], []>} : vector<512x50xf32>, vector<50x25xf32>, vector<512x25xf32> -> vector<512x25xf32>
    %c0_9 = arith.constant 0 : index
    %c0_10 = arith.constant 0 : index
    %10 = vector.load %arg5[%c0_9, %c0_10] : memref<1x25xf32, #tpu.memory_space<vmem>>, vector<1x25xf32>
    %11 = vector.broadcast %10 : vector<1x25xf32> to vector<512x25xf32>
    %12 = arith.addf %9, %11 : vector<512x25xf32>
    %cst_11 = arith.constant 0.000000e+00 : f32
    %13 = vector.broadcast %cst_11 : f32 to vector<512x25xf32>
    %14 = arith.maximumf %12, %13 : vector<512x25xf32>
    %c0_12 = arith.constant 0 : index
    %c0_13 = arith.constant 0 : index
    %15 = vector.load %arg6[%c0_12, %c0_13] : memref<1x25xf32, #tpu.memory_space<vmem>>, vector<1x25xf32>
    %cst_14 = arith.constant dense<0.000000e+00> : vector<1x512xf32>
    %16 = tpu.matmul %15, %14, %cst_14 {dimension_numbers = #tpu.dot_dimension_numbers<[1], [1], [0], [0], [0, 0, 1, 0], [], []>} : vector<1x25xf32>, vector<512x25xf32>, vector<1x512xf32> -> vector<1x512xf32>
    %c0_15 = arith.constant 0 : index
    %c0_16 = arith.constant 0 : index
    %17 = vector.load %arg7[%c0_15, %c0_16] : memref<1x1xf32, #tpu.memory_space<vmem>>, vector<1x1xf32>
    %18 = vector.broadcast %17 : vector<1x1xf32> to vector<1x512xf32>
    %19 = arith.addf %16, %18 : vector<1x512xf32>
    %20 = arith.negf %19 : vector<1x512xf32>
    %21 = math.exp %20 : vector<1x512xf32>
    %cst_17 = arith.constant 1.000000e+00 : f32
    %22 = vector.broadcast %cst_17 : f32 to vector<1x512xf32>
    %23 = arith.addf %22, %21 : vector<1x512xf32>
    %24 = arith.divf %22, %23 : vector<1x512xf32>
    %cst_18 = arith.constant 1.000000e+00 : f32
    %25 = vector.broadcast %cst_18 : f32 to vector<1x512xf32>
    %26 = arith.subf %25, %24 : vector<1x512xf32>
    %27 = tpu.concatenate %24, %26 in 0 : vector<1x512xf32>, vector<1x512xf32> -> vector<2x512xf32>
    %c0_19 = arith.constant 0 : index
    %c0_20 = arith.constant 0 : index
    %28 = vector.load %arg8[%c0_19, %c0_20] : memref<2x512xf32, #tpu.memory_space<vmem>>, vector<2x512xf32>
    tpu.vector_store %arg8[%c0_19, %c0_20], %27 {strides = array<i32>} : memref<2x512xf32, #tpu.memory_space<vmem>>, vector<2x512xf32>,
    return
  }
  func.func @transform_0(%arg0: i32) -> (i32, i32) {
    %c0_i32 = arith.constant 0 : i32
    %c0_i32_0 = arith.constant 0 : i32
    return %arg0, %c0_i32 : i32, i32
  }
  func.func @transform_1(%arg0: i32) -> (i32, i32) {
    %c0_i32 = arith.constant 0 : i32
    %c0_i32_0 = arith.constant 0 : i32
    %c0_i32_1 = arith.constant 0 : i32
    return %c0_i32, %c0_i32_0 : i32, i32
  }
  func.func @transform_2(%arg0: i32) -> (i32, i32) {
    %c0_i32 = arith.constant 0 : i32
    %c0_i32_0 = arith.constant 0 : i32
    %c0_i32_1 = arith.constant 0 : i32
    return %c0_i32, %c0_i32_0 : i32, i32
  }
  func.func @transform_3(%arg0: i32) -> (i32, i32) {
    %c0_i32 = arith.constant 0 : i32
    %c0_i32_0 = arith.constant 0 : i32
    %c0_i32_1 = arith.constant 0 : i32
    return %c0_i32, %c0_i32_0 : i32, i32
  }
  func.func @transform_4(%arg0: i32) -> (i32, i32) {
    %c0_i32 = arith.constant 0 : i32
    %c0_i32_0 = arith.constant 0 : i32
    %c0_i32_1 = arith.constant 0 : i32
    return %c0_i32, %c0_i32_0 : i32, i32
  }
  func.func @transform_5(%arg0: i32) -> (i32, i32) {
    %c0_i32 = arith.constant 0 : i32
    %c0_i32_0 = arith.constant 0 : i32
    %c0_i32_1 = arith.constant 0 : i32
    return %c0_i32, %c0_i32_0 : i32, i32
  }
  func.func @transform_6(%arg0: i32) -> (i32, i32) {
    %c0_i32 = arith.constant 0 : i32
    %c0_i32_0 = arith.constant 0 : i32
    %c0_i32_1 = arith.constant 0 : i32
    return %c0_i32, %c0_i32_0 : i32, i32
  }
  func.func @transform_7(%arg0: i32) -> (i32, i32) {
    %c0_i32 = arith.constant 0 : i32
    %c0_i32_0 = arith.constant 0 : i32
    return %c0_i32, %arg0 : i32, i32
  }
}

</mosaic_0001>

<llo_original>
// kernel: classifier_forward.1
$region0: #{classifier_forward.1}
  #allocation0 [shape = 'u32[]', space=smem, size = 0x4, offset = 0x4, fixed_abs, tag = 'smem constant byte address 0x4 - core index']
  #allocation1 [shape = 'u32[144,128]{1,0:T(1,128)}', space=vmem, size = 0x12000, scoped, tag = 'internal scratch']
  #allocation2 [shape = 'f32[1,1]{1,0:T(1,128)S(1)}', space=vmem, size = 0x200, scoped, tag = 'scoped memory for classifier_forward.1']
  %s0 = inlined_call_operand.vmem [shape: bf16[512,32], index: 0, kind: input, shape index: {}]
  %s1 = inlined_call_operand.vmem [shape: bf16[32,50], index: 1, kind: input, shape index: {}]
  %s2 = inlined_call_operand.vmem [shape: f32[1,50], index: 2, kind: input, shape index: {}]
  %s3 = inlined_call_operand.vmem [shape: f32[50,25], index: 3, kind: input, shape index: {}]
  %s4 = inlined_call_operand.vmem [shape: f32[1,25], index: 4, kind: input, shape index: {}]
  %s5 = inlined_call_operand.vmem [shape: f32[1,25], index: 5, kind: input, shape index: {}]
  %s6 = inlined_call_operand.<no memory space> [shape: f32[1,1], index: 6, kind: input, shape index: {}]
  %s7 = inlined_call_operand.vmem [shape: f32[2,512], index: 7, kind: output, shape index: {}]
  %s8 = sld [smem:[#allocation0]]
  $region38: #{classifier_forward.1} parent=0
    _
  %s10 = ssub.s32 1, %s8
  %s11 = scalar_select 0, %s10, %s8
  %v12 = vstv %s6
  %13 = vst [vmem:[#allocation2] sm:$0x1] %v12
  // Predicated region
  $region2: #{classifier_forward.1} parent=0 // pred_check
    _
  $region3: #{classifier_forward.1} parent=0 // pred_check_branch
    %15 = sbr.rel (0) target = $region5
  $region4: #{classifier_forward.1} parent=0 // pred_region
    _
  $region5: #{classifier_forward.1} parent=0 // pred_fallthru
    _
  // Predicated region
  $region6: #{classifier_forward.1} parent=0 // pred_check
    _
  $region7: #{classifier_forward.1} parent=0 // pred_check_branch
    %17 = sbr.rel (0) target = $region9
  $region8: #{classifier_forward.1} parent=0 // pred_region
    _
  $region9: #{classifier_forward.1} parent=0 // pred_fallthru
    _
  // Predicated region
  $region10: #{classifier_forward.1} parent=0 // pred_check
    _
  $region11: #{classifier_forward.1} parent=0 // pred_check_branch
    %19 = sbr.rel (0) target = $region13
  $region12: #{classifier_forward.1} parent=0 // pred_region
    _
  $region13: #{classifier_forward.1} parent=0 // pred_fallthru
    _
  // Predicated region
  $region14: #{classifier_forward.1} parent=0 // pred_check
    _
  $region15: #{classifier_forward.1} parent=0 // pred_check_branch
    %21 = sbr.rel (0) target = $region17
  $region16: #{classifier_forward.1} parent=0 // pred_region
    _
  $region17: #{classifier_forward.1} parent=0 // pred_fallthru
    _
  // Predicated region
  $region18: #{classifier_forward.1} parent=0 // pred_check
    _
  $region19: #{classifier_forward.1} parent=0 // pred_check_branch
    %23 = sbr.rel (0) target = $region21
  $region20: #{classifier_forward.1} parent=0 // pred_region
    _
  $region21: #{classifier_forward.1} parent=0 // pred_fallthru
    _
  // Predicated region
  $region22: #{classifier_forward.1} parent=0 // pred_check
    _
  $region23: #{classifier_forward.1} parent=0 // pred_check_branch
    %25 = sbr.rel (0) target = $region25
  $region24: #{classifier_forward.1} parent=0 // pred_region
    _
  $region25: #{classifier_forward.1} parent=0 // pred_fallthru
    _
  // Predicated region
  $region26: #{classifier_forward.1} parent=0 // pred_check
    _
  $region27: #{classifier_forward.1} parent=0 // pred_check_branch
    %27 = sbr.rel (0) target = $region29
  $region28: #{classifier_forward.1} parent=0 // pred_region
    _
  $region29: #{classifier_forward.1} parent=0 // pred_fallthru
    _
  %v29 = vld [vmem:[%s0] sm:$0xf]
  %v30 = vld [vmem:[%s0 + $0x4] sm:$0xf]
  %v31 = vld [vmem:[%s0 + $0x8] sm:$0xf]
  %v32 = vld [vmem:[%s0 + $0xc] sm:$0xf]
  %v33 = vld [vmem:[%s0 + $0x10] sm:$0xf]
  %v34 = vld [vmem:[%s0 + $0x14] sm:$0xf]
  %v35 = vld [vmem:[%s0 + $0x18] sm:$0xf]
  %v36 = vld [vmem:[%s0 + $0x1c] sm:$0xf]
  %v37 = vld [vmem:[%s0 + $0x20] sm:$0xf]
  %v38 = vld [vmem:[%s0 + $0x24] sm:$0xf]
  %v39 = vld [vmem:[%s0 + $0x28] sm:$0xf]
  %v40 = vld [vmem:[%s0 + $0x2c] sm:$0xf]
  %v41 = vld [vmem:[%s0 + $0x30] sm:$0xf]
  %v42 = vld [vmem:[%s0 + $0x34] sm:$0xf]
  %v43 = vld [vmem:[%s0 + $0x38] sm:$0xf]
  %v44 = vld [vmem:[%s0 + $0x3c] sm:$0xf]
  %v45 = vld [vmem:[%s0 + $0x40] sm:$0xf]
  %v46 = vld [vmem:[%s0 + $0x44] sm:$0xf]
  %v47 = vld [vmem:[%s0 + $0x48] sm:$0xf]
  %v48 = vld [vmem:[%s0 + $0x4c] sm:$0xf]
  %v49 = vld [vmem:[%s0 + $0x50] sm:$0xf]
  %v50 = vld [vmem:[%s0 + $0x54] sm:$0xf]
  %v51 = vld [vmem:[%s0 + $0x58] sm:$0xf]
  %v52 = vld [vmem:[%s0 + $0x5c] sm:$0xf]
  %v53 = vld [vmem:[%s0 + $0x60] sm:$0xf]
  %v54 = vld [vmem:[%s0 + $0x64] sm:$0xf]
  %v55 = vld [vmem:[%s0 + $0x68] sm:$0xf]
  %v56 = vld [vmem:[%s0 + $0x6c] sm:$0xf]
  %v57 = vld [vmem:[%s0 + $0x70] sm:$0xf]
  %v58 = vld [vmem:[%s0 + $0x74] sm:$0xf]
  %v59 = vld [vmem:[%s0 + $0x78] sm:$0xf]
  %v60 = vld [vmem:[%s0 + $0x7c] sm:$0xf]
  %v61 = vld [vmem:[%s0 + $0x80] sm:$0xf]
  %v62 = vld [vmem:[%s0 + $0x84] sm:$0xf]
  %v63 = vld [vmem:[%s0 + $0x88] sm:$0xf]
  %v64 = vld [vmem:[%s0 + $0x8c] sm:$0xf]
  %v65 = vld [vmem:[%s0 + $0x90] sm:$0xf]
  %v66 = vld [vmem:[%s0 + $0x94] sm:$0xf]
  %v67 = vld [vmem:[%s0 + $0x98] sm:$0xf]
  %v68 = vld [vmem:[%s0 + $0x9c] sm:$0xf]
  %v69 = vld [vmem:[%s0 + $0xa0] sm:$0xf]
  %v70 = vld [vmem:[%s0 + $0xa4] sm:$0xf]
  %v71 = vld [vmem:[%s0 + $0xa8] sm:$0xf]
  %v72 = vld [vmem:[%s0 + $0xac] sm:$0xf]
  %v73 = vld [vmem:[%s0 + $0xb0] sm:$0xf]
  %v74 = vld [vmem:[%s0 + $0xb4] sm:$0xf]
  %v75 = vld [vmem:[%s0 + $0xb8] sm:$0xf]
  %v76 = vld [vmem:[%s0 + $0xbc] sm:$0xf]
  %v77 = vld [vmem:[%s0 + $0xc0] sm:$0xf]
  %v78 = vld [vmem:[%s0 + $0xc4] sm:$0xf]
  %v79 = vld [vmem:[%s0 + $0xc8] sm:$0xf]
  %v80 = vld [vmem:[%s0 + $0xcc] sm:$0xf]
  %v81 = vld [vmem:[%s0 + $0xd0] sm:$0xf]
  %v82 = vld [vmem:[%s0 + $0xd4] sm:$0xf]
  %v83 = vld [vmem:[%s0 + $0xd8] sm:$0xf]
  %v84 = vld [vmem:[%s0 + $0xdc] sm:$0xf]
  %v85 = vld [vmem:[%s0 + $0xe0] sm:$0xf]
  %v86 = vld [vmem:[%s0 + $0xe4] sm:$0xf]
  %v87 = vld [vmem:[%s0 + $0xe8] sm:$0xf]
  %v88 = vld [vmem:[%s0 + $0xec] sm:$0xf]
  %v89 = vld [vmem:[%s0 + $0xf0] sm:$0xf]
  %v90 = vld [vmem:[%s0 + $0xf4] sm:$0xf]
  %v91 = vld [vmem:[%s0 + $0xf8] sm:$0xf]
  %v92 = vld [vmem:[%s0 + $0xfc] sm:$0xf]
  %v93 = vld [vmem:[%s1] sm:$0xf]
  %v94 = vld [vmem:[%s1 + $0x4] sm:$0xf]
  %v95 = vld [vmem:[%s1 + $0x8] sm:$0xf]
  %v96 = vld [vmem:[%s1 + $0xc] sm:$0xf]
  %v97 = vld [vmem:[%s2] sm:$0x1]
  %v99 = vlaneseq
  %v100 = vshrl.u32 %v99, 7
  %v101 = vsub.s32 0, %v100
  %v102 = vrot.slane %v97, %v101
  %v168 = vunpack.c.l.b16 %v29
  %v169 = vunpack.c.l.b16 %v30
  %v170 = vunpack.c.l.b16 %v31
  %v171 = vunpack.c.l.b16 %v32
  %v172 = vunpack.c.l.b16 %v33
  %v173 = vunpack.c.l.b16 %v34
  %v174 = vunpack.c.l.b16 %v35
  %v175 = vunpack.c.l.b16 %v36
  %v176 = vunpack.c.l.b16 %v37
  %v177 = vunpack.c.l.b16 %v38
  %v178 = vunpack.c.l.b16 %v39
  %v179 = vunpack.c.l.b16 %v40
  %v180 = vunpack.c.l.b16 %v41
  %v181 = vunpack.c.l.b16 %v42
  %v182 = vunpack.c.l.b16 %v43
  %v183 = vunpack.c.l.b16 %v44
  %v184 = vunpack.c.l.b16 %v45
  %v185 = vunpack.c.l.b16 %v46
  %v186 = vunpack.c.l.b16 %v47
  %v187 = vunpack.c.l.b16 %v48
  %v188 = vunpack.c.l.b16 %v49
  %v189 = vunpack.c.l.b16 %v50
  %v190 = vunpack.c.l.b16 %v51
  %v191 = vunpack.c.l.b16 %v52
  %v192 = vunpack.c.l.b16 %v53
  %v193 = vunpack.c.l.b16 %v54
  %v194 = vunpack.c.l.b16 %v55
  %v195 = vunpack.c.l.b16 %v56
  %v196 = vunpack.c.l.b16 %v57
  %v197 = vunpack.c.l.b16 %v58
  %v198 = vunpack.c.l.b16 %v59
  %v199 = vunpack.c.l.b16 %v60
  %v200 = vunpack.c.l.b16 %v61
  %v201 = vunpack.c.l.b16 %v62
  %v202 = vunpack.c.l.b16 %v63
  %v203 = vunpack.c.l.b16 %v64
  %v204 = vunpack.c.l.b16 %v65
  %v205 = vunpack.c.l.b16 %v66
  %v206 = vunpack.c.l.b16 %v67
  %v207 = vunpack.c.l.b16 %v68
  %v208 = vunpack.c.l.b16 %v69
  %v209 = vunpack.c.l.b16 %v70
  %v210 = vunpack.c.l.b16 %v71
  %v211 = vunpack.c.l.b16 %v72
  %v212 = vunpack.c.l.b16 %v73
  %v213 = vunpack.c.l.b16 %v74
  %v214 = vunpack.c.l.b16 %v75
  %v215 = vunpack.c.l.b16 %v76
  %v216 = vunpack.c.l.b16 %v77
  %v217 = vunpack.c.l.b16 %v78
  %v218 = vunpack.c.l.b16 %v79
  %v219 = vunpack.c.l.b16 %v80
  %v220 = vunpack.c.l.b16 %v81
  %v221 = vunpack.c.l.b16 %v82
  %v222 = vunpack.c.l.b16 %v83
  %v223 = vunpack.c.l.b16 %v84
  %v224 = vunpack.c.l.b16 %v85
  %v225 = vunpack.c.l.b16 %v86
  %v226 = vunpack.c.l.b16 %v87
  %v227 = vunpack.c.l.b16 %v88
  %v228 = vunpack.c.l.b16 %v89
  %v229 = vunpack.c.l.b16 %v90
  %v230 = vunpack.c.l.b16 %v91
  %v231 = vunpack.c.l.b16 %v92
  %v232 = vpack.c.b16 %v169, %v168
  %v233 = vpack.c.b16 %v171, %v170
  %v234 = vpack.c.b16 %v173, %v172
  %v235 = vpack.c.b16 %v175, %v174
  %v236 = vpack.c.b16 %v177, %v176
  %v237 = vpack.c.b16 %v179, %v178
  %v238 = vpack.c.b16 %v181, %v180
  %v239 = vpack.c.b16 %v183, %v182
  %v240 = vpack.c.b16 %v185, %v184
  %v241 = vpack.c.b16 %v187, %v186
  %v242 = vpack.c.b16 %v189, %v188
  %v243 = vpack.c.b16 %v191, %v190
  %v244 = vpack.c.b16 %v193, %v192
  %v245 = vpack.c.b16 %v195, %v194
  %v246 = vpack.c.b16 %v197, %v196
  %v247 = vpack.c.b16 %v199, %v198
  %v248 = vpack.c.b16 %v201, %v200
  %v249 = vpack.c.b16 %v203, %v202
  %v250 = vpack.c.b16 %v205, %v204
  %v251 = vpack.c.b16 %v207, %v206
  %v252 = vpack.c.b16 %v209, %v208
  %v253 = vpack.c.b16 %v211, %v210
  %v254 = vpack.c.b16 %v213, %v212
  %v255 = vpack.c.b16 %v215, %v214
  %v256 = vpack.c.b16 %v217, %v216
  %v257 = vpack.c.b16 %v219, %v218
  %v258 = vpack.c.b16 %v221, %v220
  %v259 = vpack.c.b16 %v223, %v222
  %v260 = vpack.c.b16 %v225, %v224
  %v261 = vpack.c.b16 %v227, %v226
  %v262 = vpack.c.b16 %v229, %v228
  %v263 = vpack.c.b16 %v231, %v230
  %v268 = vunpack.c.l.b16 %v93
  %v269 = vunpack.c.l.b16 %v94
  %v270 = vunpack.c.l.b16 %v95
  %v271 = vunpack.c.l.b16 %v96
  %v272 = vpack.c.b16 %v269, %v268
  %v273 = vpack.c.b16 %v271, %v270
  %vm276 = vcmask 261120
  %v278 = vsel %vm276, %v232, 0
  %v281 = vsel %vm276, %v233, 0
  %v284 = vsel %vm276, %v234, 0
  %v287 = vsel %vm276, %v235, 0
  %v290 = vsel %vm276, %v236, 0
  %v293 = vsel %vm276, %v237, 0
  %v296 = vsel %vm276, %v238, 0
  %v299 = vsel %vm276, %v239, 0
  %v302 = vsel %vm276, %v240, 0
  %v305 = vsel %vm276, %v241, 0
  %v308 = vsel %vm276, %v242, 0
  %v311 = vsel %vm276, %v243, 0
  %v314 = vsel %vm276, %v244, 0
  %v317 = vsel %vm276, %v245, 0
  %v320 = vsel %vm276, %v246, 0
  %v323 = vsel %vm276, %v247, 0
  %v326 = vsel %vm276, %v248, 0
  %v329 = vsel %vm276, %v249, 0
  %v332 = vsel %vm276, %v250, 0
  %v335 = vsel %vm276, %v251, 0
  %v338 = vsel %vm276, %v252, 0
  %v341 = vsel %vm276, %v253, 0
  %v344 = vsel %vm276, %v254, 0
  %v347 = vsel %vm276, %v255, 0
  %v350 = vsel %vm276, %v256, 0
  %v353 = vsel %vm276, %v257, 0
  %v356 = vsel %vm276, %v258, 0
  %v359 = vsel %vm276, %v259, 0
  %v362 = vsel %vm276, %v260, 0
  %v365 = vsel %vm276, %v261, 0
  %v368 = vsel %vm276, %v262, 0
  %v371 = vsel %vm276, %v263, 0
  %373 = vmatprep.subr.bf16.mxu0 0
  %374 = vmatpush1.bf16.msra.mxu0 0
  %375 = vmatprep.subr.bf16.mxu0 0
  %376 = vmatpush1.bf16.msra.mxu0 0
  %377 = vmatprep.subr.bf16.mxu0 0
  %378 = vmatpush1.bf16.msra.mxu0 0
  %379 = vmatprep.subr.bf16.mxu0 0
  %380 = vmatpush1.bf16.msra.mxu0 0
  %381 = vmatprep.subr.bf16.mxu0 0
  %382 = vmatpush1.bf16.msra.mxu0 0
  %383 = vmatprep.subr.bf16.mxu0 0
  %384 = vmatpush1.bf16.msra.mxu0 0
  %385 = vmatprep.subr.bf16.mxu0 0
  %386 = vmatpush1.bf16.msra.mxu0 %v273
  %387 = vmatprep.subr.bf16.mxu0 0
  %388 = vmatpush1.bf16.msra.mxu0 %v272
  %389 = vmatprep.subr.bf16.mxu0 0
  %390 = vmatpush2.bf16.msra.mxu0 0
  %391 = vmatprep.subr.bf16.mxu0 0
  %392 = vmatpush2.bf16.msra.mxu0 0
  %393 = vmatprep.subr.bf16.mxu0 0
  %394 = vmatpush2.bf16.msra.mxu0 0
  %395 = vmatprep.subr.bf16.mxu0 0
  %396 = vmatpush2.bf16.msra.mxu0 0
  %397 = vmatprep.subr.bf16.mxu0 0
  %398 = vmatpush2.bf16.msra.mxu0 0
  %399 = vmatprep.subr.bf16.mxu0 0
  %400 = vmatpush2.bf16.msra.mxu0 0
  %401 = vmatprep.subr.bf16.mxu0 0
  %402 = vmatpush2.bf16.msra.mxu0 0
  %403 = vmatprep.subr.bf16.mxu0 0
  %404 = vmatpush2.bf16.msra.mxu0 0
  %405 = vmatprep.mubr.bf16.mxu0 0
  %406 = vmatmul.mubr.bf16.gmra.mxu0 %v278
  %v407 = vpop.f32.mrf.mxu0
  %v408 = vadd.f32 %v102, %v407
  %v409 = vpop.f32.mrf.mxu0
  %v410 = vpop.f32.mrf.mxu0
  %v411 = vadd.f32 %v102, %v410
  %v412 = vpop.f32.mrf.mxu0
  %413 = vmatprep.mubr.bf16.mxu0 0
  %414 = vmatmul.mubr.bf16.gmra.mxu0 %v281
  %v415 = vpop.f32.mrf.mxu0
  %v416 = vadd.f32 %v102, %v415
  %v417 = vpop.f32.mrf.mxu0
  %v418 = vpop.f32.mrf.mxu0
  %v419 = vadd.f32 %v102, %v418
  %v420 = vpop.f32.mrf.mxu0
  %421 = vmatprep.mubr.bf16.mxu0 0
  %422 = vmatmul.mubr.bf16.gmra.mxu0 %v284
  %v423 = vpop.f32.mrf.mxu0
  %v424 = vadd.f32 %v102, %v423
  %v425 = vpop.f32.mrf.mxu0
  %v426 = vpop.f32.mrf.mxu0
  %v427 = vadd.f32 %v102, %v426
  %v428 = vpop.f32.mrf.mxu0
  %429 = vmatprep.mubr.bf16.mxu0 0
  %430 = vmatmul.mubr.bf16.gmra.mxu0 %v287
  %v431 = vpop.f32.mrf.mxu0
  %v432 = vadd.f32 %v102, %v431
  %v433 = vpop.f32.mrf.mxu0
  %v434 = vpop.f32.mrf.mxu0
  %v435 = vadd.f32 %v102, %v434
  %v436 = vpop.f32.mrf.mxu0
  %437 = vmatprep.mubr.bf16.mxu0 0
  %438 = vmatmul.mubr.bf16.gmra.mxu0 %v290
  %v439 = vpop.f32.mrf.mxu0
  %v440 = vadd.f32 %v102, %v439
  %v441 = vpop.f32.mrf.mxu0
  %v442 = vpop.f32.mrf.mxu0
  %v443 = vadd.f32 %v102, %v442
  %v444 = vpop.f32.mrf.mxu0
  %445 = vmatprep.mubr.bf16.mxu0 0
  %446 = vmatmul.mubr.bf16.gmra.mxu0 %v293
  %v447 = vpop.f32.mrf.mxu0
  %v448 = vadd.f32 %v102, %v447
  %v449 = vpop.f32.mrf.mxu0
  %v450 = vpop.f32.mrf.mxu0
  %v451 = vadd.f32 %v102, %v450
  %v452 = vpop.f32.mrf.mxu0
  %453 = vmatprep.mubr.bf16.mxu0 0
  %454 = vmatmul.mubr.bf16.gmra.mxu0 %v296
  %v455 = vpop.f32.mrf.mxu0
  %v456 = vadd.f32 %v102, %v455
  %v457 = vpop.f32.mrf.mxu0
  %v458 = vpop.f32.mrf.mxu0
  %v459 = vadd.f32 %v102, %v458
  %v460 = vpop.f32.mrf.mxu0
  %461 = vmatprep.mubr.bf16.mxu0 0
  %462 = vmatmul.mubr.bf16.gmra.mxu0 %v299
  %v463 = vpop.f32.mrf.mxu0
  %v464 = vadd.f32 %v102, %v463
  %v465 = vpop.f32.mrf.mxu0
  %v466 = vpop.f32.mrf.mxu0
  %v467 = vadd.f32 %v102, %v466
  %v468 = vpop.f32.mrf.mxu0
  %469 = vmatprep.mubr.bf16.mxu0 0
  %470 = vmatmul.mubr.bf16.gmra.mxu0 %v302
  %v471 = vpop.f32.mrf.mxu0
  %v472 = vadd.f32 %v102, %v471
  %v473 = vpop.f32.mrf.mxu0
  %v474 = vpop.f32.mrf.mxu0
  %v475 = vadd.f32 %v102, %v474
  %v476 = vpop.f32.mrf.mxu0
  %477 = vmatprep.mubr.bf16.mxu0 0
  %478 = vmatmul.mubr.bf16.gmra.mxu0 %v305
  %v479 = vpop.f32.mrf.mxu0
  %v480 = vadd.f32 %v102, %v479
  %v481 = vpop.f32.mrf.mxu0
  %v482 = vpop.f32.mrf.mxu0
  %v483 = vadd.f32 %v102, %v482
  %v484 = vpop.f32.mrf.mxu0
  %485 = vmatprep.mubr.bf16.mxu0 0
  %486 = vmatmul.mubr.bf16.gmra.mxu0 %v308
  %v487 = vpop.f32.mrf.mxu0
  %v488 = vadd.f32 %v102, %v487
  %v489 = vpop.f32.mrf.mxu0
  %v490 = vpop.f32.mrf.mxu0
  %v491 = vadd.f32 %v102, %v490
  %v492 = vpop.f32.mrf.mxu0
  %493 = vmatprep.mubr.bf16.mxu0 0
  %494 = vmatmul.mubr.bf16.gmra.mxu0 %v311
  %v495 = vpop.f32.mrf.mxu0
  %v496 = vadd.f32 %v102, %v495
  %v497 = vpop.f32.mrf.mxu0
  %v498 = vpop.f32.mrf.mxu0
  %v499 = vadd.f32 %v102, %v498
  %v500 = vpop.f32.mrf.mxu0
  %501 = vmatprep.mubr.bf16.mxu0 0
  %502 = vmatmul.mubr.bf16.gmra.mxu0 %v314
  %v503 = vpop.f32.mrf.mxu0
  %v504 = vadd.f32 %v102, %v503
  %v505 = vpop.f32.mrf.mxu0
  %v506 = vpop.f32.mrf.mxu0
  %v507 = vadd.f32 %v102, %v506
  %v508 = vpop.f32.mrf.mxu0
  %509 = vmatprep.mubr.bf16.mxu0 0
  %510 = vmatmul.mubr.bf16.gmra.mxu0 %v317
  %v511 = vpop.f32.mrf.mxu0
  %v512 = vadd.f32 %v102, %v511
  %v513 = vpop.f32.mrf.mxu0
  %v514 = vpop.f32.mrf.mxu0
  %v515 = vadd.f32 %v102, %v514
  %v516 = vpop.f32.mrf.mxu0
  %517 = vmatprep.mubr.bf16.mxu0 0
  %518 = vmatmul.mubr.bf16.gmra.mxu0 %v320
  %v519 = vpop.f32.mrf.mxu0
  %v520 = vadd.f32 %v102, %v519
  %v521 = vpop.f32.mrf.mxu0
  %v522 = vpop.f32.mrf.mxu0
  %v523 = vadd.f32 %v102, %v522
  %v524 = vpop.f32.mrf.mxu0
  %525 = vmatprep.mubr.bf16.mxu0 0
  %526 = vmatmul.mubr.bf16.gmra.mxu0 %v323
  %v527 = vpop.f32.mrf.mxu0
  %v528 = vadd.f32 %v102, %v527
  %v529 = vpop.f32.mrf.mxu0
  %v530 = vpop.f32.mrf.mxu0
  %v531 = vadd.f32 %v102, %v530
  %v532 = vpop.f32.mrf.mxu0
  %533 = vmatprep.mubr.bf16.mxu0 0
  %534 = vmatmul.mubr.bf16.gmra.mxu0 %v326
  %v535 = vpop.f32.mrf.mxu0
  %v536 = vadd.f32 %v102, %v535
  %v537 = vpop.f32.mrf.mxu0
  %v538 = vpop.f32.mrf.mxu0
  %v539 = vadd.f32 %v102, %v538
  %v540 = vpop.f32.mrf.mxu0
  %541 = vmatprep.mubr.bf16.mxu0 0
  %542 = vmatmul.mubr.bf16.gmra.mxu0 %v329
  %v543 = vpop.f32.mrf.mxu0
  %v544 = vadd.f32 %v102, %v543
  %v545 = vpop.f32.mrf.mxu0
  %v546 = vpop.f32.mrf.mxu0
  %v547 = vadd.f32 %v102, %v546
  %v548 = vpop.f32.mrf.mxu0
  %549 = vmatprep.mubr.bf16.mxu0 0
  %550 = vmatmul.mubr.bf16.gmra.mxu0 %v332
  %v551 = vpop.f32.mrf.mxu0
  %v552 = vadd.f32 %v102, %v551
  %v553 = vpop.f32.mrf.mxu0
  %v554 = vpop.f32.mrf.mxu0
  %v555 = vadd.f32 %v102, %v554
  %v556 = vpop.f32.mrf.mxu0
  %557 = vmatprep.mubr.bf16.mxu0 0
  %558 = vmatmul.mubr.bf16.gmra.mxu0 %v335
  %v559 = vpop.f32.mrf.mxu0
  %v560 = vadd.f32 %v102, %v559
  %v561 = vpop.f32.mrf.mxu0
  %v562 = vpop.f32.mrf.mxu0
  %v563 = vadd.f32 %v102, %v562
  %v564 = vpop.f32.mrf.mxu0
  %565 = vmatprep.mubr.bf16.mxu0 0
  %566 = vmatmul.mubr.bf16.gmra.mxu0 %v338
  %v567 = vpop.f32.mrf.mxu0
  %v568 = vadd.f32 %v102, %v567
  %v569 = vpop.f32.mrf.mxu0
  %v570 = vpop.f32.mrf.mxu0
  %v571 = vadd.f32 %v102, %v570
  %v572 = vpop.f32.mrf.mxu0
  %573 = vmatprep.mubr.bf16.mxu0 0
  %574 = vmatmul.mubr.bf16.gmra.mxu0 %v341
  %v575 = vpop.f32.mrf.mxu0
  %v576 = vadd.f32 %v102, %v575
  %v577 = vpop.f32.mrf.mxu0
  %v578 = vpop.f32.mrf.mxu0
  %v579 = vadd.f32 %v102, %v578
  %v580 = vpop.f32.mrf.mxu0
  %581 = vmatprep.mubr.bf16.mxu0 0
  %582 = vmatmul.mubr.bf16.gmra.mxu0 %v344
  %v583 = vpop.f32.mrf.mxu0
  %v584 = vadd.f32 %v102, %v583
  %v585 = vpop.f32.mrf.mxu0
  %v586 = vpop.f32.mrf.mxu0
  %v587 = vadd.f32 %v102, %v586
  %v588 = vpop.f32.mrf.mxu0
  %589 = vmatprep.mubr.bf16.mxu0 0
  %590 = vmatmul.mubr.bf16.gmra.mxu0 %v347
  %v591 = vpop.f32.mrf.mxu0
  %v592 = vadd.f32 %v102, %v591
  %v593 = vpop.f32.mrf.mxu0
  %v594 = vpop.f32.mrf.mxu0
  %v595 = vadd.f32 %v102, %v594
  %v596 = vpop.f32.mrf.mxu0
  %597 = vmatprep.mubr.bf16.mxu0 0
  %598 = vmatmul.mubr.bf16.gmra.mxu0 %v350
  %v599 = vpop.f32.mrf.mxu0
  %v600 = vadd.f32 %v102, %v599
  %v601 = vpop.f32.mrf.mxu0
  %v602 = vpop.f32.mrf.mxu0
  %v603 = vadd.f32 %v102, %v602
  %v604 = vpop.f32.mrf.mxu0
  %605 = vmatprep.mubr.bf16.mxu0 0
  %606 = vmatmul.mubr.bf16.gmra.mxu0 %v353
  %v607 = vpop.f32.mrf.mxu0
  %v608 = vadd.f32 %v102, %v607
  %v609 = vpop.f32.mrf.mxu0
  %v610 = vpop.f32.mrf.mxu0
  %v611 = vadd.f32 %v102, %v610
  %v612 = vpop.f32.mrf.mxu0
  %613 = vmatprep.mubr.bf16.mxu0 0
  %614 = vmatmul.mubr.bf16.gmra.mxu0 %v356
  %v615 = vpop.f32.mrf.mxu0
  %v616 = vadd.f32 %v102, %v615
  %v617 = vpop.f32.mrf.mxu0
  %v618 = vpop.f32.mrf.mxu0
  %v619 = vadd.f32 %v102, %v618
  %v620 = vpop.f32.mrf.mxu0
  %621 = vmatprep.mubr.bf16.mxu0 0
  %622 = vmatmul.mubr.bf16.gmra.mxu0 %v359
  %v623 = vpop.f32.mrf.mxu0
  %v624 = vadd.f32 %v102, %v623
  %v625 = vpop.f32.mrf.mxu0
  %v626 = vpop.f32.mrf.mxu0
  %v627 = vadd.f32 %v102, %v626
  %v628 = vpop.f32.mrf.mxu0
  %629 = vmatprep.mubr.bf16.mxu0 0
  %630 = vmatmul.mubr.bf16.gmra.mxu0 %v362
  %v631 = vpop.f32.mrf.mxu0
  %v632 = vadd.f32 %v102, %v631
  %v633 = vpop.f32.mrf.mxu0
  %v634 = vpop.f32.mrf.mxu0
  %v635 = vadd.f32 %v102, %v634
  %v636 = vpop.f32.mrf.mxu0
  %637 = vmatprep.mubr.bf16.mxu0 0
  %638 = vmatmul.mubr.bf16.gmra.mxu0 %v365
  %v639 = vpop.f32.mrf.mxu0
  %v640 = vadd.f32 %v102, %v639
  %v641 = vpop.f32.mrf.mxu0
  %v642 = vpop.f32.mrf.mxu0
  %v643 = vadd.f32 %v102, %v642
  %v644 = vpop.f32.mrf.mxu0
  %645 = vmatprep.mubr.bf16.mxu0 0
  %646 = vmatmul.mubr.bf16.gmra.mxu0 %v368
  %v647 = vpop.f32.mrf.mxu0
  %v648 = vadd.f32 %v102, %v647
  %v649 = vpop.f32.mrf.mxu0
  %v650 = vpop.f32.mrf.mxu0
  %v651 = vadd.f32 %v102, %v650
  %v652 = vpop.f32.mrf.mxu0
  %653 = vmatprep.mubr.bf16.mxu0 0
  %654 = vmatmul.mubr.bf16.gmra.mxu0 %v371
  %v655 = vpop.f32.mrf.mxu0
  %v656 = vadd.f32 %v102, %v655
  %v657 = vpop.f32.mrf.mxu0
  %v658 = vpop.f32.mrf.mxu0
  %v659 = vadd.f32 %v102, %v658
  %v660 = vpop.f32.mrf.mxu0
  %661 = vdwg.mxu0
  %v662 = vmax.f32 %v408, 0.0
  %v663 = vmax.f32 %v411, 0.0
  %v664 = vmax.f32 %v416, 0.0
  %v665 = vmax.f32 %v419, 0.0
  %v666 = vmax.f32 %v424, 0.0
  %v667 = vmax.f32 %v427, 0.0
  %v668 = vmax.f32 %v432, 0.0
  %v669 = vmax.f32 %v435, 0.0
  %v670 = vmax.f32 %v440, 0.0
  %v671 = vmax.f32 %v443, 0.0
  %v672 = vmax.f32 %v448, 0.0
  %v673 = vmax.f32 %v451, 0.0
  %v674 = vmax.f32 %v456, 0.0
  %v675 = vmax.f32 %v459, 0.0
  %v676 = vmax.f32 %v464, 0.0
  %v677 = vmax.f32 %v467, 0.0
  %v678 = vmax.f32 %v472, 0.0
  %v679 = vmax.f32 %v475, 0.0
  %v680 = vmax.f32 %v480, 0.0
  %v681 = vmax.f32 %v483, 0.0
  %v682 = vmax.f32 %v488, 0.0
  %v683 = vmax.f32 %v491, 0.0
  %v684 = vmax.f32 %v496, 0.0
  %v685 = vmax.f32 %v499, 0.0
  %v686 = vmax.f32 %v504, 0.0
  %v687 = vmax.f32 %v507, 0.0
  %v688 = vmax.f32 %v512, 0.0
  %v689 = vmax.f32 %v515, 0.0
  %v690 = vmax.f32 %v520, 0.0
  %v691 = vmax.f32 %v523, 0.0
  %v692 = vmax.f32 %v528, 0.0
  %v693 = vmax.f32 %v531, 0.0
  %v694 = vmax.f32 %v536, 0.0
  %v695 = vmax.f32 %v539, 0.0
  %v696 = vmax.f32 %v544, 0.0
  %v697 = vmax.f32 %v547, 0.0
  %v698 = vmax.f32 %v552, 0.0
  %v699 = vmax.f32 %v555, 0.0
  %v700 = vmax.f32 %v560, 0.0
  %v701 = vmax.f32 %v563, 0.0
  %v702 = vmax.f32 %v568, 0.0
  %v703 = vmax.f32 %v571, 0.0
  %v704 = vmax.f32 %v576, 0.0
  %v705 = vmax.f32 %v579, 0.0
  %v706 = vmax.f32 %v584, 0.0
  %v707 = vmax.f32 %v587, 0.0
  %v708 = vmax.f32 %v592, 0.0
  %v709 = vmax.f32 %v595, 0.0
  %v710 = vmax.f32 %v600, 0.0
  %v711 = vmax.f32 %v603, 0.0
  %v712 = vmax.f32 %v608, 0.0
  %v713 = vmax.f32 %v611, 0.0
  %v714 = vmax.f32 %v616, 0.0
  %v715 = vmax.f32 %v619, 0.0
  %v716 = vmax.f32 %v624, 0.0
  %v717 = vmax.f32 %v627, 0.0
  %v718 = vmax.f32 %v632, 0.0
  %v719 = vmax.f32 %v635, 0.0
  %v720 = vmax.f32 %v640, 0.0
  %v721 = vmax.f32 %v643, 0.0
  %v722 = vmax.f32 %v648, 0.0
  %v723 = vmax.f32 %v651, 0.0
  %v724 = vmax.f32 %v656, 0.0
  %v725 = vmax.f32 %v659, 0.0
  %v726 = vld [vmem:[%s3] sm:$0xff]
  %v727 = vld [vmem:[%s3 + $0x8] sm:$0xff]
  %v728 = vld [vmem:[%s3 + $0x10] sm:$0xff]
  %v729 = vld [vmem:[%s3 + $0x18] sm:$0xff]
  %v730 = vld [vmem:[%s3 + $0x20] sm:$0xff]
  %v731 = vld [vmem:[%s3 + $0x28] sm:$0xff]
  %v732 = vld [vmem:[%s3 + $0x30] sm:$0x3]
  %v733 = vld [vmem:[%s4] sm:$0x1]
  %v735 = vlaneseq
  %v736 = vshrl.u32 %v735, 7
  %v737 = vsub.s32 0, %v736
  %v738 = vrot.slane %v733, %v737
  %vm740 = vcmask 408576
  %v742 = vsel %vm740, %v662, 0
  %v745 = vsel %vm740, %v663, 0
  %v748 = vsel %vm740, %v664, 0
  %v751 = vsel %vm740, %v665, 0
  %v754 = vsel %vm740, %v666, 0
  %v757 = vsel %vm740, %v667, 0
  %v760 = vsel %vm740, %v668, 0
  %v763 = vsel %vm740, %v669, 0
  %v766 = vsel %vm740, %v670, 0
  %v769 = vsel %vm740, %v671, 0
  %v772 = vsel %vm740, %v672, 0
  %v775 = vsel %vm740, %v673, 0
  %v778 = vsel %vm740, %v674, 0
  %v781 = vsel %vm740, %v675, 0
  %v784 = vsel %vm740, %v676, 0
  %v787 = vsel %vm740, %v677, 0
  %v790 = vsel %vm740, %v678, 0
  %v793 = vsel %vm740, %v679, 0
  %v796 = vsel %vm740, %v680, 0
  %v799 = vsel %vm740, %v681, 0
  %v802 = vsel %vm740, %v682, 0
  %v805 = vsel %vm740, %v683, 0
  %v808 = vsel %vm740, %v684, 0
  %v811 = vsel %vm740, %v685, 0
  %v814 = vsel %vm740, %v686, 0
  %v817 = vsel %vm740, %v687, 0
  %v820 = vsel %vm740, %v688, 0
  %v823 = vsel %vm740, %v689, 0
  %v826 = vsel %vm740, %v690, 0
  %v829 = vsel %vm740, %v691, 0
  %v832 = vsel %vm740, %v692, 0
  %v835 = vsel %vm740, %v693, 0
  %v838 = vsel %vm740, %v694, 0
  %v841 = vsel %vm740, %v695, 0
  %v844 = vsel %vm740, %v696, 0
  %v847 = vsel %vm740, %v697, 0
  %v850 = vsel %vm740, %v698, 0
  %v853 = vsel %vm740, %v699, 0
  %v856 = vsel %vm740, %v700, 0
  %v859 = vsel %vm740, %v701, 0
  %v862 = vsel %vm740, %v702, 0
  %v865 = vsel %vm740, %v703, 0
  %v868 = vsel %vm740, %v704, 0
  %v871 = vsel %vm740, %v705, 0
  %v874 = vsel %vm740, %v706, 0
  %v877 = vsel %vm740, %v707, 0
  %v880 = vsel %vm740, %v708, 0
  %v883 = vsel %vm740, %v709, 0
  %v886 = vsel %vm740, %v710, 0
  %v889 = vsel %vm740, %v711, 0
  %v892 = vsel %vm740, %v712, 0
  %v895 = vsel %vm740, %v713, 0
  %v898 = vsel %vm740, %v714, 0
  %v901 = vsel %vm740, %v715, 0
  %v904 = vsel %vm740, %v716, 0
  %v907 = vsel %vm740, %v717, 0
  %v910 = vsel %vm740, %v718, 0
  %v913 = vsel %vm740, %v719, 0
  %v916 = vsel %vm740, %v720, 0
  %v919 = vsel %vm740, %v721, 0
  %v922 = vsel %vm740, %v722, 0
  %v925 = vsel %vm740, %v723, 0
  %v928 = vsel %vm740, %v724, 0
  %v931 = vsel %vm740, %v725, 0
  %vm933 = vcmask 1041408
  %v935 = vsel %vm933, %v732, 0
  %937 = vmatprep.subr.mxu0 0.0
  %938 = vmatpush1.msra.mxu0 0.0
  %939 = vmatprep.subr.mxu0 0.0
  %940 = vmatpush1.msra.mxu0 0.0
  %941 = vmatprep.subr.mxu0 0.0
  %942 = vmatpush1.msra.mxu0 0.0
  %943 = vmatprep.subr.mxu0 0.0
  %944 = vmatpush1.msra.mxu0 0.0
  %945 = vmatprep.subr.mxu0 0.0
  %946 = vmatpush1.msra.mxu0 0.0
  %947 = vmatprep.subr.mxu0 0.0
  %948 = vmatpush1.msra.mxu0 0.0
  %949 = vmatprep.subr.mxu0 0.0
  %950 = vmatpush1.msra.mxu0 0.0
  %951 = vmatprep.subr.mxu0 0.0
  %952 = vmatpush1.msra.mxu0 0.0
  %953 = vmatprep.subr.mxu0 0.0
  %954 = vmatpush1.msra.mxu0 0.0
  %955 = vmatprep.subr.mxu0 0.0
  %956 = vmatpush1.msra.mxu0 %v935
  %957 = vmatprep.subr.mxu0 0.0
  %958 = vmatpush1.msra.mxu0 %v731
  %959 = vmatprep.subr.mxu0 0.0
  %960 = vmatpush1.msra.mxu0 %v730
  %961 = vmatprep.subr.mxu0 0.0
  %962 = vmatpush1.msra.mxu0 %v729
  %963 = vmatprep.subr.mxu0 0.0
  %964 = vmatpush1.msra.mxu0 %v728
  %965 = vmatprep.subr.mxu0 0.0
  %966 = vmatpush1.msra.mxu0 %v727
  %967 = vmatprep.subr.mxu0 0.0
  %968 = vmatpush1.msra.mxu0 %v726
  %969 = vmatprep.subr.mxu0 0.0
  %970 = vmatpush2.msra.mxu0 0.0
  %971 = vmatprep.subr.mxu0 0.0
  %972 = vmatpush2.msra.mxu0 0.0
  %973 = vmatprep.subr.mxu0 0.0
  %974 = vmatpush2.msra.mxu0 0.0
  %975 = vmatprep.subr.mxu0 0.0
  %976 = vmatpush2.msra.mxu0 0.0
  %977 = vmatprep.subr.mxu0 0.0
  %978 = vmatpush2.msra.mxu0 0.0
  %979 = vmatprep.subr.mxu0 0.0
  %980 = vmatpush2.msra.mxu0 0.0
  %981 = vmatprep.subr.mxu0 0.0
  %982 = vmatpush2.msra.mxu0 0.0
  %983 = vmatprep.subr.mxu0 0.0
  %984 = vmatpush2.msra.mxu0 0.0
  %985 = vmatprep.subr.mxu0 0.0
  %986 = vmatpush2.msra.mxu0 0.0
  %987 = vmatprep.subr.mxu0 0.0
  %988 = vmatpush2.msra.mxu0 0.0
  %989 = vmatprep.subr.mxu0 0.0
  %990 = vmatpush2.msra.mxu0 0.0
  %991 = vmatprep.subr.mxu0 0.0
  %992 = vmatpush2.msra.mxu0 0.0
  %993 = vmatprep.subr.mxu0 0.0
  %994 = vmatpush2.msra.mxu0 0.0
  %995 = vmatprep.subr.mxu0 0.0
  %996 = vmatpush2.msra.mxu0 0.0
  %997 = vmatprep.subr.mxu0 0.0
  %998 = vmatpush2.msra.mxu0 0.0
  %999 = vmatprep.subr.mxu0 0.0
  %1000 = vmatpush2.msra.mxu0 0.0
  %1001 = vmatprep.mubr.f32.mxu0 0.0
  %1002 = vmatmul.mubr.f32.gmra.mxu0 %v742
  %v1003 = vpop.f32.mrf.mxu0
  %v1004 = vadd.f32 %v738, %v1003
  %v1005 = vpop.f32.mrf.mxu0
  %1006 = vmatprep.mubr.f32.mxu0 0.0
  %1007 = vmatmul.mubr.f32.gmra.mxu0 %v745
  %v1008 = vpop.f32.mrf.mxu0
  %v1009 = vadd.f32 %v738, %v1008
  %v1010 = vpop.f32.mrf.mxu0
  %1011 = vmatprep.mubr.f32.mxu0 0.0
  %1012 = vmatmul.mubr.f32.gmra.mxu0 %v748
  %v1013 = vpop.f32.mrf.mxu0
  %v1014 = vadd.f32 %v738, %v1013
  %v1015 = vpop.f32.mrf.mxu0
  %1016 = vmatprep.mubr.f32.mxu0 0.0
  %1017 = vmatmul.mubr.f32.gmra.mxu0 %v751
  %v1018 = vpop.f32.mrf.mxu0
  %v1019 = vadd.f32 %v738, %v1018
  %v1020 = vpop.f32.mrf.mxu0
  %1021 = vmatprep.mubr.f32.mxu0 0.0
  %1022 = vmatmul.mubr.f32.gmra.mxu0 %v754
  %v1023 = vpop.f32.mrf.mxu0
  %v1024 = vadd.f32 %v738, %v1023
  %v1025 = vpop.f32.mrf.mxu0
  %1026 = vmatprep.mubr.f32.mxu0 0.0
  %1027 = vmatmul.mubr.f32.gmra.mxu0 %v757
  %v1028 = vpop.f32.mrf.mxu0
  %v1029 = vadd.f32 %v738, %v1028
  %v1030 = vpop.f32.mrf.mxu0
  %1031 = vmatprep.mubr.f32.mxu0 0.0
  %1032 = vmatmul.mubr.f32.gmra.mxu0 %v760
  %v1033 = vpop.f32.mrf.mxu0
  %v1034 = vadd.f32 %v738, %v1033
  %v1035 = vpop.f32.mrf.mxu0
  %1036 = vmatprep.mubr.f32.mxu0 0.0
  %1037 = vmatmul.mubr.f32.gmra.mxu0 %v763
  %v1038 = vpop.f32.mrf.mxu0
  %v1039 = vadd.f32 %v738, %v1038
  %v1040 = vpop.f32.mrf.mxu0
  %1041 = vmatprep.mubr.f32.mxu0 0.0
  %1042 = vmatmul.mubr.f32.gmra.mxu0 %v766
  %v1043 = vpop.f32.mrf.mxu0
  %v1044 = vadd.f32 %v738, %v1043
  %v1045 = vpop.f32.mrf.mxu0
  %1046 = vmatprep.mubr.f32.mxu0 0.0
  %1047 = vmatmul.mubr.f32.gmra.mxu0 %v769
  %v1048 = vpop.f32.mrf.mxu0
  %v1049 = vadd.f32 %v738, %v1048
  %v1050 = vpop.f32.mrf.mxu0
  %1051 = vmatprep.mubr.f32.mxu0 0.0
  %1052 = vmatmul.mubr.f32.gmra.mxu0 %v772
  %v1053 = vpop.f32.mrf.mxu0
  %v1054 = vadd.f32 %v738, %v1053
  %v1055 = vpop.f32.mrf.mxu0
  %1056 = vmatprep.mubr.f32.mxu0 0.0
  %1057 = vmatmul.mubr.f32.gmra.mxu0 %v775
  %v1058 = vpop.f32.mrf.mxu0
  %v1059 = vadd.f32 %v738, %v1058
  %v1060 = vpop.f32.mrf.mxu0
  %1061 = vmatprep.mubr.f32.mxu0 0.0
  %1062 = vmatmul.mubr.f32.gmra.mxu0 %v778
  %v1063 = vpop.f32.mrf.mxu0
  %v1064 = vadd.f32 %v738, %v1063
  %v1065 = vpop.f32.mrf.mxu0
  %1066 = vmatprep.mubr.f32.mxu0 0.0
  %1067 = vmatmul.mubr.f32.gmra.mxu0 %v781
  %v1068 = vpop.f32.mrf.mxu0
  %v1069 = vadd.f32 %v738, %v1068
  %v1070 = vpop.f32.mrf.mxu0
  %1071 = vmatprep.mubr.f32.mxu0 0.0
  %1072 = vmatmul.mubr.f32.gmra.mxu0 %v784
  %v1073 = vpop.f32.mrf.mxu0
  %v1074 = vadd.f32 %v738, %v1073
  %v1075 = vpop.f32.mrf.mxu0
  %1076 = vmatprep.mubr.f32.mxu0 0.0
  %1077 = vmatmul.mubr.f32.gmra.mxu0 %v787
  %v1078 = vpop.f32.mrf.mxu0
  %v1079 = vadd.f32 %v738, %v1078
  %v1080 = vpop.f32.mrf.mxu0
  %1081 = vmatprep.mubr.f32.mxu0 0.0
  %1082 = vmatmul.mubr.f32.gmra.mxu0 %v790
  %v1083 = vpop.f32.mrf.mxu0
  %v1084 = vadd.f32 %v738, %v1083
  %v1085 = vpop.f32.mrf.mxu0
  %1086 = vmatprep.mubr.f32.mxu0 0.0
  %1087 = vmatmul.mubr.f32.gmra.mxu0 %v793
  %v1088 = vpop.f32.mrf.mxu0
  %v1089 = vadd.f32 %v738, %v1088
  %v1090 = vpop.f32.mrf.mxu0
  %1091 = vmatprep.mubr.f32.mxu0 0.0
  %1092 = vmatmul.mubr.f32.gmra.mxu0 %v796
  %v1093 = vpop.f32.mrf.mxu0
  %v1094 = vadd.f32 %v738, %v1093
  %v1095 = vpop.f32.mrf.mxu0
  %1096 = vmatprep.mubr.f32.mxu0 0.0
  %1097 = vmatmul.mubr.f32.gmra.mxu0 %v799
  %v1098 = vpop.f32.mrf.mxu0
  %v1099 = vadd.f32 %v738, %v1098
  %v1100 = vpop.f32.mrf.mxu0
  %1101 = vmatprep.mubr.f32.mxu0 0.0
  %1102 = vmatmul.mubr.f32.gmra.mxu0 %v802
  %v1103 = vpop.f32.mrf.mxu0
  %v1104 = vadd.f32 %v738, %v1103
  %v1105 = vpop.f32.mrf.mxu0
  %1106 = vmatprep.mubr.f32.mxu0 0.0
  %1107 = vmatmul.mubr.f32.gmra.mxu0 %v805
  %v1108 = vpop.f32.mrf.mxu0
  %v1109 = vadd.f32 %v738, %v1108
  %v1110 = vpop.f32.mrf.mxu0
  %1111 = vmatprep.mubr.f32.mxu0 0.0
  %1112 = vmatmul.mubr.f32.gmra.mxu0 %v808
  %v1113 = vpop.f32.mrf.mxu0
  %v1114 = vadd.f32 %v738, %v1113
  %v1115 = vpop.f32.mrf.mxu0
  %1116 = vmatprep.mubr.f32.mxu0 0.0
  %1117 = vmatmul.mubr.f32.gmra.mxu0 %v811
  %v1118 = vpop.f32.mrf.mxu0
  %v1119 = vadd.f32 %v738, %v1118
  %v1120 = vpop.f32.mrf.mxu0
  %1121 = vmatprep.mubr.f32.mxu0 0.0
  %1122 = vmatmul.mubr.f32.gmra.mxu0 %v814
  %v1123 = vpop.f32.mrf.mxu0
  %v1124 = vadd.f32 %v738, %v1123
  %v1125 = vpop.f32.mrf.mxu0
  %1126 = vmatprep.mubr.f32.mxu0 0.0
  %1127 = vmatmul.mubr.f32.gmra.mxu0 %v817
  %v1128 = vpop.f32.mrf.mxu0
  %v1129 = vadd.f32 %v738, %v1128
  %v1130 = vpop.f32.mrf.mxu0
  %1131 = vmatprep.mubr.f32.mxu0 0.0
  %1132 = vmatmul.mubr.f32.gmra.mxu0 %v820
  %v1133 = vpop.f32.mrf.mxu0
  %v1134 = vadd.f32 %v738, %v1133
  %v1135 = vpop.f32.mrf.mxu0
  %1136 = vmatprep.mubr.f32.mxu0 0.0
  %1137 = vmatmul.mubr.f32.gmra.mxu0 %v823
  %v1138 = vpop.f32.mrf.mxu0
  %v1139 = vadd.f32 %v738, %v1138
  %v1140 = vpop.f32.mrf.mxu0
  %1141 = vmatprep.mubr.f32.mxu0 0.0
  %1142 = vmatmul.mubr.f32.gmra.mxu0 %v826
  %v1143 = vpop.f32.mrf.mxu0
  %v1144 = vadd.f32 %v738, %v1143
  %v1145 = vpop.f32.mrf.mxu0
  %1146 = vmatprep.mubr.f32.mxu0 0.0
  %1147 = vmatmul.mubr.f32.gmra.mxu0 %v829
  %v1148 = vpop.f32.mrf.mxu0
  %v1149 = vadd.f32 %v738, %v1148
  %v1150 = vpop.f32.mrf.mxu0
  %1151 = vmatprep.mubr.f32.mxu0 0.0
  %1152 = vmatmul.mubr.f32.gmra.mxu0 %v832
  %v1153 = vpop.f32.mrf.mxu0
  %v1154 = vadd.f32 %v738, %v1153
  %v1155 = vpop.f32.mrf.mxu0
  %1156 = vmatprep.mubr.f32.mxu0 0.0
  %1157 = vmatmul.mubr.f32.gmra.mxu0 %v835
  %v1158 = vpop.f32.mrf.mxu0
  %v1159 = vadd.f32 %v738, %v1158
  %v1160 = vpop.f32.mrf.mxu0
  %1161 = vmatprep.mubr.f32.mxu0 0.0
  %1162 = vmatmul.mubr.f32.gmra.mxu0 %v838
  %v1163 = vpop.f32.mrf.mxu0
  %v1164 = vadd.f32 %v738, %v1163
  %v1165 = vpop.f32.mrf.mxu0
  %1166 = vmatprep.mubr.f32.mxu0 0.0
  %1167 = vmatmul.mubr.f32.gmra.mxu0 %v841
  %v1168 = vpop.f32.mrf.mxu0
  %v1169 = vadd.f32 %v738, %v1168
  %v1170 = vpop.f32.mrf.mxu0
  %1171 = vmatprep.mubr.f32.mxu0 0.0
  %1172 = vmatmul.mubr.f32.gmra.mxu0 %v844
  %v1173 = vpop.f32.mrf.mxu0
  %v1174 = vadd.f32 %v738, %v1173
  %v1175 = vpop.f32.mrf.mxu0
  %1176 = vmatprep.mubr.f32.mxu0 0.0
  %1177 = vmatmul.mubr.f32.gmra.mxu0 %v847
  %v1178 = vpop.f32.mrf.mxu0
  %v1179 = vadd.f32 %v738, %v1178
  %v1180 = vpop.f32.mrf.mxu0
  %1181 = vmatprep.mubr.f32.mxu0 0.0
  %1182 = vmatmul.mubr.f32.gmra.mxu0 %v850
  %v1183 = vpop.f32.mrf.mxu0
  %v1184 = vadd.f32 %v738, %v1183
  %v1185 = vpop.f32.mrf.mxu0
  %1186 = vmatprep.mubr.f32.mxu0 0.0
  %1187 = vmatmul.mubr.f32.gmra.mxu0 %v853
  %v1188 = vpop.f32.mrf.mxu0
  %v1189 = vadd.f32 %v738, %v1188
  %v1190 = vpop.f32.mrf.mxu0
  %1191 = vmatprep.mubr.f32.mxu0 0.0
  %1192 = vmatmul.mubr.f32.gmra.mxu0 %v856
  %v1193 = vpop.f32.mrf.mxu0
  %v1194 = vadd.f32 %v738, %v1193
  %v1195 = vpop.f32.mrf.mxu0
  %1196 = vmatprep.mubr.f32.mxu0 0.0
  %1197 = vmatmul.mubr.f32.gmra.mxu0 %v859
  %v1198 = vpop.f32.mrf.mxu0
  %v1199 = vadd.f32 %v738, %v1198
  %v1200 = vpop.f32.mrf.mxu0
  %1201 = vmatprep.mubr.f32.mxu0 0.0
  %1202 = vmatmul.mubr.f32.gmra.mxu0 %v862
  %v1203 = vpop.f32.mrf.mxu0
  %v1204 = vadd.f32 %v738, %v1203
  %v1205 = vpop.f32.mrf.mxu0
  %1206 = vmatprep.mubr.f32.mxu0 0.0
  %1207 = vmatmul.mubr.f32.gmra.mxu0 %v865
  %v1208 = vpop.f32.mrf.mxu0
  %v1209 = vadd.f32 %v738, %v1208
  %v1210 = vpop.f32.mrf.mxu0
  %1211 = vmatprep.mubr.f32.mxu0 0.0
  %1212 = vmatmul.mubr.f32.gmra.mxu0 %v868
  %v1213 = vpop.f32.mrf.mxu0
  %v1214 = vadd.f32 %v738, %v1213
  %v1215 = vpop.f32.mrf.mxu0
  %1216 = vmatprep.mubr.f32.mxu0 0.0
  %1217 = vmatmul.mubr.f32.gmra.mxu0 %v871
  %v1218 = vpop.f32.mrf.mxu0
  %v1219 = vadd.f32 %v738, %v1218
  %v1220 = vpop.f32.mrf.mxu0
  %1221 = vmatprep.mubr.f32.mxu0 0.0
  %1222 = vmatmul.mubr.f32.gmra.mxu0 %v874
  %v1223 = vpop.f32.mrf.mxu0
  %v1224 = vadd.f32 %v738, %v1223
  %v1225 = vpop.f32.mrf.mxu0
  %1226 = vmatprep.mubr.f32.mxu0 0.0
  %1227 = vmatmul.mubr.f32.gmra.mxu0 %v877
  %v1228 = vpop.f32.mrf.mxu0
  %v1229 = vadd.f32 %v738, %v1228
  %v1230 = vpop.f32.mrf.mxu0
  %1231 = vmatprep.mubr.f32.mxu0 0.0
  %1232 = vmatmul.mubr.f32.gmra.mxu0 %v880
  %v1233 = vpop.f32.mrf.mxu0
  %v1234 = vadd.f32 %v738, %v1233
  %v1235 = vpop.f32.mrf.mxu0
  %1236 = vmatprep.mubr.f32.mxu0 0.0
  %1237 = vmatmul.mubr.f32.gmra.mxu0 %v883
  %v1238 = vpop.f32.mrf.mxu0
  %v1239 = vadd.f32 %v738, %v1238
  %v1240 = vpop.f32.mrf.mxu0
  %1241 = vmatprep.mubr.f32.mxu0 0.0
  %1242 = vmatmul.mubr.f32.gmra.mxu0 %v886
  %v1243 = vpop.f32.mrf.mxu0
  %v1244 = vadd.f32 %v738, %v1243
  %v1245 = vpop.f32.mrf.mxu0
  %1246 = vmatprep.mubr.f32.mxu0 0.0
  %1247 = vmatmul.mubr.f32.gmra.mxu0 %v889
  %v1248 = vpop.f32.mrf.mxu0
  %v1249 = vadd.f32 %v738, %v1248
  %v1250 = vpop.f32.mrf.mxu0
  %1251 = vmatprep.mubr.f32.mxu0 0.0
  %1252 = vmatmul.mubr.f32.gmra.mxu0 %v892
  %v1253 = vpop.f32.mrf.mxu0
  %v1254 = vadd.f32 %v738, %v1253
  %v1255 = vpop.f32.mrf.mxu0
  %1256 = vmatprep.mubr.f32.mxu0 0.0
  %1257 = vmatmul.mubr.f32.gmra.mxu0 %v895
  %v1258 = vpop.f32.mrf.mxu0
  %v1259 = vadd.f32 %v738, %v1258
  %v1260 = vpop.f32.mrf.mxu0
  %1261 = vmatprep.mubr.f32.mxu0 0.0
  %1262 = vmatmul.mubr.f32.gmra.mxu0 %v898
  %v1263 = vpop.f32.mrf.mxu0
  %v1264 = vadd.f32 %v738, %v1263
  %v1265 = vpop.f32.mrf.mxu0
  %1266 = vmatprep.mubr.f32.mxu0 0.0
  %1267 = vmatmul.mubr.f32.gmra.mxu0 %v901
  %v1268 = vpop.f32.mrf.mxu0
  %v1269 = vadd.f32 %v738, %v1268
  %v1270 = vpop.f32.mrf.mxu0
  %1271 = vmatprep.mubr.f32.mxu0 0.0
  %1272 = vmatmul.mubr.f32.gmra.mxu0 %v904
  %v1273 = vpop.f32.mrf.mxu0
  %v1274 = vadd.f32 %v738, %v1273
  %v1275 = vpop.f32.mrf.mxu0
  %1276 = vmatprep.mubr.f32.mxu0 0.0
  %1277 = vmatmul.mubr.f32.gmra.mxu0 %v907
  %v1278 = vpop.f32.mrf.mxu0
  %v1279 = vadd.f32 %v738, %v1278
  %v1280 = vpop.f32.mrf.mxu0
  %1281 = vmatprep.mubr.f32.mxu0 0.0
  %1282 = vmatmul.mubr.f32.gmra.mxu0 %v910
  %v1283 = vpop.f32.mrf.mxu0
  %v1284 = vadd.f32 %v738, %v1283
  %v1285 = vpop.f32.mrf.mxu0
  %1286 = vmatprep.mubr.f32.mxu0 0.0
  %1287 = vmatmul.mubr.f32.gmra.mxu0 %v913
  %v1288 = vpop.f32.mrf.mxu0
  %v1289 = vadd.f32 %v738, %v1288
  %v1290 = vpop.f32.mrf.mxu0
  %1291 = vmatprep.mubr.f32.mxu0 0.0
  %1292 = vmatmul.mubr.f32.gmra.mxu0 %v916
  %v1293 = vpop.f32.mrf.mxu0
  %v1294 = vadd.f32 %v738, %v1293
  %v1295 = vpop.f32.mrf.mxu0
  %1296 = vmatprep.mubr.f32.mxu0 0.0
  %1297 = vmatmul.mubr.f32.gmra.mxu0 %v919
  %v1298 = vpop.f32.mrf.mxu0
  %v1299 = vadd.f32 %v738, %v1298
  %v1300 = vpop.f32.mrf.mxu0
  %1301 = vmatprep.mubr.f32.mxu0 0.0
  %1302 = vmatmul.mubr.f32.gmra.mxu0 %v922
  %v1303 = vpop.f32.mrf.mxu0
  %v1304 = vadd.f32 %v738, %v1303
  %v1305 = vpop.f32.mrf.mxu0
  %1306 = vmatprep.mubr.f32.mxu0 0.0
  %1307 = vmatmul.mubr.f32.gmra.mxu0 %v925
  %v1308 = vpop.f32.mrf.mxu0
  %v1309 = vadd.f32 %v738, %v1308
  %v1310 = vpop.f32.mrf.mxu0
  %1311 = vmatprep.mubr.f32.mxu0 0.0
  %1312 = vmatmul.mubr.f32.gmra.mxu0 %v928
  %v1313 = vpop.f32.mrf.mxu0
  %v1314 = vadd.f32 %v738, %v1313
  %v1315 = vpop.f32.mrf.mxu0
  %1316 = vmatprep.mubr.f32.mxu0 0.0
  %1317 = vmatmul.mubr.f32.gmra.mxu0 %v931
  %v1318 = vpop.f32.mrf.mxu0
  %v1319 = vadd.f32 %v738, %v1318
  %v1320 = vpop.f32.mrf.mxu0
  %1321 = vdwg.mxu0
  %v1322 = vmax.f32 %v1004, 0.0
  %v1323 = vmax.f32 %v1009, 0.0
  %v1324 = vmax.f32 %v1014, 0.0
  %v1325 = vmax.f32 %v1019, 0.0
  %v1326 = vmax.f32 %v1024, 0.0
  %v1327 = vmax.f32 %v1029, 0.0
  %v1328 = vmax.f32 %v1034, 0.0
  %v1329 = vmax.f32 %v1039, 0.0
  %v1330 = vmax.f32 %v1044, 0.0
  %v1331 = vmax.f32 %v1049, 0.0
  %v1332 = vmax.f32 %v1054, 0.0
  %v1333 = vmax.f32 %v1059, 0.0
  %v1334 = vmax.f32 %v1064, 0.0
  %v1335 = vmax.f32 %v1069, 0.0
  %v1336 = vmax.f32 %v1074, 0.0
  %v1337 = vmax.f32 %v1079, 0.0
  %v1338 = vmax.f32 %v1084, 0.0
  %v1339 = vmax.f32 %v1089, 0.0
  %v1340 = vmax.f32 %v1094, 0.0
  %v1341 = vmax.f32 %v1099, 0.0
  %v1342 = vmax.f32 %v1104, 0.0
  %v1343 = vmax.f32 %v1109, 0.0
  %v1344 = vmax.f32 %v1114, 0.0
  %v1345 = vmax.f32 %v1119, 0.0
  %v1346 = vmax.f32 %v1124, 0.0
  %v1347 = vmax.f32 %v1129, 0.0
  %v1348 = vmax.f32 %v1134, 0.0
  %v1349 = vmax.f32 %v1139, 0.0
  %v1350 = vmax.f32 %v1144, 0.0
  %v1351 = vmax.f32 %v1149, 0.0
  %v1352 = vmax.f32 %v1154, 0.0
  %v1353 = vmax.f32 %v1159, 0.0
  %v1354 = vmax.f32 %v1164, 0.0
  %v1355 = vmax.f32 %v1169, 0.0
  %v1356 = vmax.f32 %v1174, 0.0
  %v1357 = vmax.f32 %v1179, 0.0
  %v1358 = vmax.f32 %v1184, 0.0
  %v1359 = vmax.f32 %v1189, 0.0
  %v1360 = vmax.f32 %v1194, 0.0
  %v1361 = vmax.f32 %v1199, 0.0
  %v1362 = vmax.f32 %v1204, 0.0
  %v1363 = vmax.f32 %v1209, 0.0
  %v1364 = vmax.f32 %v1214, 0.0
  %v1365 = vmax.f32 %v1219, 0.0
  %v1366 = vmax.f32 %v1224, 0.0
  %v1367 = vmax.f32 %v1229, 0.0
  %v1368 = vmax.f32 %v1234, 0.0
  %v1369 = vmax.f32 %v1239, 0.0
  %v1370 = vmax.f32 %v1244, 0.0
  %v1371 = vmax.f32 %v1249, 0.0
  %v1372 = vmax.f32 %v1254, 0.0
  %v1373 = vmax.f32 %v1259, 0.0
  %v1374 = vmax.f32 %v1264, 0.0
  %v1375 = vmax.f32 %v1269, 0.0
  %v1376 = vmax.f32 %v1274, 0.0
  %v1377 = vmax.f32 %v1279, 0.0
  %v1378 = vmax.f32 %v1284, 0.0
  %v1379 = vmax.f32 %v1289, 0.0
  %v1380 = vmax.f32 %v1294, 0.0
  %v1381 = vmax.f32 %v1299, 0.0
  %v1382 = vmax.f32 %v1304, 0.0
  %v1383 = vmax.f32 %v1309, 0.0
  %v1384 = vmax.f32 %v1314, 0.0
  %v1385 = vmax.f32 %v1319, 0.0
  %v1386 = vld [vmem:[%s5] sm:$0x1]
  %v1387 = vld [vmem:[#allocation2] sm:$0x1]
  %1389 = vset.pattern.permute.xlu0 0
  %1390 = vperm.xlu0 %1389, %v1387
  %v1391 = vpop.permute.xlu0 %1390
  %v1393 = vlaneseq
  %v1394 = vshrl.u32 %v1393, 7
  %v1395 = vsub.s32 0, %v1394
  %v1396 = vrot.slane %v1391, %v1395
  %vm1397 = vcmask 203776
  %v1399 = vsel %vm1397, %v1386, 0
  %v1402 = vsel %vm1397, %v1322, 0
  %v1405 = vsel %vm1397, %v1323, 0
  %v1408 = vsel %vm1397, %v1324, 0
  %v1411 = vsel %vm1397, %v1325, 0
  %v1414 = vsel %vm1397, %v1326, 0
  %v1417 = vsel %vm1397, %v1327, 0
  %v1420 = vsel %vm1397, %v1328, 0
  %v1423 = vsel %vm1397, %v1329, 0
  %v1426 = vsel %vm1397, %v1330, 0
  %v1429 = vsel %vm1397, %v1331, 0
  %v1432 = vsel %vm1397, %v1332, 0
  %v1435 = vsel %vm1397, %v1333, 0
  %v1438 = vsel %vm1397, %v1334, 0
  %v1441 = vsel %vm1397, %v1335, 0
  %v1444 = vsel %vm1397, %v1336, 0
  %v1447 = vsel %vm1397, %v1337, 0
  %v1450 = vsel %vm1397, %v1338, 0
  %v1453 = vsel %vm1397, %v1339, 0
  %v1456 = vsel %vm1397, %v1340, 0
  %v1459 = vsel %vm1397, %v1341, 0
  %v1462 = vsel %vm1397, %v1342, 0
  %v1465 = vsel %vm1397, %v1343, 0
  %v1468 = vsel %vm1397, %v1344, 0
  %v1471 = vsel %vm1397, %v1345, 0
  %v1474 = vsel %vm1397, %v1346, 0
  %v1477 = vsel %vm1397, %v1347, 0
  %v1480 = vsel %vm1397, %v1348, 0
  %v1483 = vsel %vm1397, %v1349, 0
  %v1486 = vsel %vm1397, %v1350, 0
  %v1489 = vsel %vm1397, %v1351, 0
  %v1492 = vsel %vm1397, %v1352, 0
  %v1495 = vsel %vm1397, %v1353, 0
  %v1498 = vsel %vm1397, %v1354, 0
  %v1501 = vsel %vm1397, %v1355, 0
  %v1504 = vsel %vm1397, %v1356, 0
  %v1507 = vsel %vm1397, %v1357, 0
  %v1510 = vsel %vm1397, %v1358, 0
  %v1513 = vsel %vm1397, %v1359, 0
  %v1516 = vsel %vm1397, %v1360, 0
  %v1519 = vsel %vm1397, %v1361, 0
  %v1522 = vsel %vm1397, %v1362, 0
  %v1525 = vsel %vm1397, %v1363, 0
  %v1528 = vsel %vm1397, %v1364, 0
  %v1531 = vsel %vm1397, %v1365, 0
  %v1534 = vsel %vm1397, %v1366, 0
  %v1537 = vsel %vm1397, %v1367, 0
  %v1540 = vsel %vm1397, %v1368, 0
  %v1543 = vsel %vm1397, %v1369, 0
  %v1546 = vsel %vm1397, %v1370, 0
  %v1549 = vsel %vm1397, %v1371, 0
  %v1552 = vsel %vm1397, %v1372, 0
  %v1555 = vsel %vm1397, %v1373, 0
  %v1558 = vsel %vm1397, %v1374, 0
  %v1561 = vsel %vm1397, %v1375, 0
  %v1564 = vsel %vm1397, %v1376, 0
  %v1567 = vsel %vm1397, %v1377, 0
  %v1570 = vsel %vm1397, %v1378, 0
  %v1573 = vsel %vm1397, %v1379, 0
  %v1576 = vsel %vm1397, %v1380, 0
  %v1579 = vsel %vm1397, %v1381, 0
  %v1582 = vsel %vm1397, %v1382, 0
  %v1585 = vsel %vm1397, %v1383, 0
  %v1588 = vsel %vm1397, %v1384, 0
  %v1591 = vsel %vm1397, %v1385, 0
  %1593 = vmatprep.subr.mxu0 0.0
  %1594 = vmatpush1.xpose.msra.mxu0 %v1447
  %1595 = vmatprep.subr.mxu0 0.0
  %1596 = vmatpush1.xpose.msra.mxu0 %v1444
  %1597 = vmatprep.subr.mxu0 0.0
  %1598 = vmatpush1.xpose.msra.mxu0 %v1441
  %1599 = vmatprep.subr.mxu0 0.0
  %1600 = vmatpush1.xpose.msra.mxu0 %v1438
  %1601 = vmatprep.subr.mxu0 0.0
  %1602 = vmatpush1.xpose.msra.mxu0 %v1435
  %1603 = vmatprep.subr.mxu0 0.0
  %1604 = vmatpush1.xpose.msra.mxu0 %v1432
  %1605 = vmatprep.subr.mxu0 0.0
  %1606 = vmatpush1.xpose.msra.mxu0 %v1429
  %1607 = vmatprep.subr.mxu0 0.0
  %1608 = vmatpush1.xpose.msra.mxu0 %v1426
  %1609 = vmatprep.subr.mxu0 0.0
  %1610 = vmatpush1.xpose.msra.mxu0 %v1423
  %1611 = vmatprep.subr.mxu0 0.0
  %1612 = vmatpush1.xpose.msra.mxu0 %v1420
  %1613 = vmatprep.subr.mxu0 0.0
  %1614 = vmatpush1.xpose.msra.mxu0 %v1417
  %1615 = vmatprep.subr.mxu0 0.0
  %1616 = vmatpush1.xpose.msra.mxu0 %v1414
  %1617 = vmatprep.subr.mxu0 0.0
  %1618 = vmatpush1.xpose.msra.mxu0 %v1411
  %1619 = vmatprep.subr.mxu0 0.0
  %1620 = vmatpush1.xpose.msra.mxu0 %v1408
  %1621 = vmatprep.subr.mxu0 0.0
  %1622 = vmatpush1.xpose.msra.mxu0 %v1405
  %1623 = vmatprep.subr.mxu0 0.0
  %1624 = vmatpush1.xpose.msra.mxu0 %v1402
  %1625 = vmatprep.subr.mxu0 0.0
  %1626 = vmatpush2.xpose.msra.mxu0 %v1495
  %1627 = vmatprep.subr.mxu0 0.0
  %1628 = vmatpush2.xpose.msra.mxu0 %v1492
  %1629 = vmatprep.subr.mxu0 0.0
  %1630 = vmatpush2.xpose.msra.mxu0 %v1489
  %1631 = vmatprep.subr.mxu0 0.0
  %1632 = vmatpush2.xpose.msra.mxu0 %v1486
  %1633 = vmatprep.subr.mxu0 0.0
  %1634 = vmatpush2.xpose.msra.mxu0 %v1483
  %1635 = vmatprep.subr.mxu0 0.0
  %1636 = vmatpush2.xpose.msra.mxu0 %v1480
  %1637 = vmatprep.subr.mxu0 0.0
  %1638 = vmatpush2.xpose.msra.mxu0 %v1477
  %1639 = vmatprep.subr.mxu0 0.0
  %1640 = vmatpush2.xpose.msra.mxu0 %v1474
  %1641 = vmatprep.subr.mxu0 0.0
  %1642 = vmatpush2.xpose.msra.mxu0 %v1471
  %1643 = vmatprep.subr.mxu0 0.0
  %1644 = vmatpush2.xpose.msra.mxu0 %v1468
  %1645 = vmatprep.subr.mxu0 0.0
  %1646 = vmatpush2.xpose.msra.mxu0 %v1465
  %1647 = vmatprep.subr.mxu0 0.0
  %1648 = vmatpush2.xpose.msra.mxu0 %v1462
  %1649 = vmatprep.subr.mxu0 0.0
  %1650 = vmatpush2.xpose.msra.mxu0 %v1459
  %1651 = vmatprep.subr.mxu0 0.0
  %1652 = vmatpush2.xpose.msra.mxu0 %v1456
  %1653 = vmatprep.subr.mxu0 0.0
  %1654 = vmatpush2.xpose.msra.mxu0 %v1453
  %1655 = vmatprep.subr.mxu0 0.0
  %1656 = vmatpush2.xpose.msra.mxu0 %v1450
  %1657 = vmatprep.mubr.f32.mxu0 0.0
  %1658 = vmatmul.mubr.f32.gmra.mxu0 %v1399
  %v1659 = vpop.f32.mrf.mxu0
  %v1660 = vadd.f32 %v1396, %v1659
  %v1661 = vpop.f32.mrf.mxu0
  %v1662 = vadd.f32 %v1396, %v1661
  %1663 = vdwg.mxu0
  %1664 = vmatprep.subr.mxu0 0.0
  %1665 = vmatpush1.xpose.msra.mxu0 %v1543
  %1666 = vmatprep.subr.mxu0 0.0
  %1667 = vmatpush1.xpose.msra.mxu0 %v1540
  %1668 = vmatprep.subr.mxu0 0.0
  %1669 = vmatpush1.xpose.msra.mxu0 %v1537
  %1670 = vmatprep.subr.mxu0 0.0
  %1671 = vmatpush1.xpose.msra.mxu0 %v1534
  %1672 = vmatprep.subr.mxu0 0.0
  %1673 = vmatpush1.xpose.msra.mxu0 %v1531
  %1674 = vmatprep.subr.mxu0 0.0
  %1675 = vmatpush1.xpose.msra.mxu0 %v1528
  %1676 = vmatprep.subr.mxu0 0.0
  %1677 = vmatpush1.xpose.msra.mxu0 %v1525
  %1678 = vmatprep.subr.mxu0 0.0
  %1679 = vmatpush1.xpose.msra.mxu0 %v1522
  %1680 = vmatprep.subr.mxu0 0.0
  %1681 = vmatpush1.xpose.msra.mxu0 %v1519
  %1682 = vmatprep.subr.mxu0 0.0
  %1683 = vmatpush1.xpose.msra.mxu0 %v1516
  %1684 = vmatprep.subr.mxu0 0.0
  %1685 = vmatpush1.xpose.msra.mxu0 %v1513
  %1686 = vmatprep.subr.mxu0 0.0
  %1687 = vmatpush1.xpose.msra.mxu0 %v1510
  %1688 = vmatprep.subr.mxu0 0.0
  %1689 = vmatpush1.xpose.msra.mxu0 %v1507
  %1690 = vmatprep.subr.mxu0 0.0
  %1691 = vmatpush1.xpose.msra.mxu0 %v1504
  %1692 = vmatprep.subr.mxu0 0.0
  %1693 = vmatpush1.xpose.msra.mxu0 %v1501
  %1694 = vmatprep.subr.mxu0 0.0
  %1695 = vmatpush1.xpose.msra.mxu0 %v1498
  %1696 = vmatprep.subr.mxu0 0.0
  %1697 = vmatpush2.xpose.msra.mxu0 %v1591
  %1698 = vmatprep.subr.mxu0 0.0
  %1699 = vmatpush2.xpose.msra.mxu0 %v1588
  %1700 = vmatprep.subr.mxu0 0.0
  %1701 = vmatpush2.xpose.msra.mxu0 %v1585
  %1702 = vmatprep.subr.mxu0 0.0
  %1703 = vmatpush2.xpose.msra.mxu0 %v1582
  %1704 = vmatprep.subr.mxu0 0.0
  %1705 = vmatpush2.xpose.msra.mxu0 %v1579
  %1706 = vmatprep.subr.mxu0 0.0
  %1707 = vmatpush2.xpose.msra.mxu0 %v1576
  %1708 = vmatprep.subr.mxu0 0.0
  %1709 = vmatpush2.xpose.msra.mxu0 %v1573
  %1710 = vmatprep.subr.mxu0 0.0
  %1711 = vmatpush2.xpose.msra.mxu0 %v1570
  %1712 = vmatprep.subr.mxu0 0.0
  %1713 = vmatpush2.xpose.msra.mxu0 %v1567
  %1714 = vmatprep.subr.mxu0 0.0
  %1715 = vmatpush2.xpose.msra.mxu0 %v1564
  %1716 = vmatprep.subr.mxu0 0.0
  %1717 = vmatpush2.xpose.msra.mxu0 %v1561
  %1718 = vmatprep.subr.mxu0 0.0
  %1719 = vmatpush2.xpose.msra.mxu0 %v1558
  %1720 = vmatprep.subr.mxu0 0.0
  %1721 = vmatpush2.xpose.msra.mxu0 %v1555
  %1722 = vmatprep.subr.mxu0 0.0
  %1723 = vmatpush2.xpose.msra.mxu0 %v1552
  %1724 = vmatprep.subr.mxu0 0.0
  %1725 = vmatpush2.xpose.msra.mxu0 %v1549
  %1726 = vmatprep.subr.mxu0 0.0
  %1727 = vmatpush2.xpose.msra.mxu0 %v1546
  %1728 = vmatprep.mubr.f32.mxu0 0.0
  %1729 = vmatmul.mubr.f32.gmra.mxu0 %v1399
  %v1730 = vpop.f32.mrf.mxu0
  %v1731 = vadd.f32 %v1396, %v1730
  %v1732 = vpop.f32.mrf.mxu0
  %v1733 = vadd.f32 %v1396, %v1732
  %1734 = vdwg.mxu0
  %v1735 = vxor.u32 %v1660, 2147483648
  %v1736 = vxor.u32 %v1662, 2147483648
  %v1737 = vxor.u32 %v1731, 2147483648
  %v1738 = vxor.u32 %v1733, 2147483648
  %v1739 = vmul.f32 %v1735, 1.442695
  %v1740 = vpow.pop %v1739
  %v1741 = vmul.f32 %v1736, 1.442695
  %v1742 = vpow.pop %v1741
  %v1743 = vmul.f32 %v1737, 1.442695
  %v1744 = vpow.pop %v1743
  %v1745 = vmul.f32 %v1738, 1.442695
  %v1746 = vpow.pop %v1745
  %v1747 = vadd.f32 %v1740, 1.0
  %v1748 = vadd.f32 %v1742, 1.0
  %v1749 = vadd.f32 %v1744, 1.0
  %v1750 = vadd.f32 %v1746, 1.0
  %v1751 = vrcp.pop %v1747
  %v1752 = vmul.f32 1.0, %v1751
  %v1753 = vrcp.pop %v1748
  %v1754 = vmul.f32 1.0, %v1753
  %v1755 = vrcp.pop %v1749
  %v1756 = vmul.f32 1.0, %v1755
  %v1757 = vrcp.pop %v1750
  %v1758 = vmul.f32 1.0, %v1757
  %v1759 = vsub.f32 1.0, %v1752
  %v1760 = vsub.f32 1.0, %v1754
  %v1761 = vsub.f32 1.0, %v1756
  %v1762 = vsub.f32 1.0, %v1758
  %v1767 = vrot.slane %v1759, 7
  %v1768 = vrot.slane %v1760, 7
  %v1769 = vrot.slane %v1761, 7
  %v1770 = vrot.slane %v1762, 7
  %vm1775 = vcmask 1040384
  %v1776 = vsel %vm1775, %v1752, %v1767
  %v1777 = vsel %vm1775, %v1754, %v1768
  %v1778 = vsel %vm1775, %v1756, %v1769
  %v1779 = vsel %vm1775, %v1758, %v1770
  %v1784 = vcombine.low %v1776, %v1777
  %v1785 = vcombine.low %v1778, %v1779
  %v1787 = vunpack.c.l.s4 1983009808
  %v1788 = vunpack.c.0.s8 %v1787
  %v1789 = vlaneseq
  %v1790 = vshrl.u32 %v1789, 7
  %v1791 = vsub.s32 %v1788, %v1790
  %v1792 = vrot.slane %v1784, %v1791
  %v1794 = vunpack.c.l.s4 1983009808
  %v1795 = vunpack.c.0.s8 %v1794
  %v1796 = vlaneseq
  %v1797 = vshrl.u32 %v1796, 7
  %v1798 = vsub.s32 %v1795, %v1797
  %v1799 = vrot.slane %v1785, %v1798
  %v1800 = vcombine.low %v1792, %v1799
  %1802 = vst [vmem:[%s7] sm:$0xff] %v1800
  // Predicated region
  $region30: #{classifier_forward.1} parent=0 // pred_check
    _
  $region31: #{classifier_forward.1} parent=0 // pred_check_branch
    %1804 = sbr.rel (0) target = $region33
  $region32: #{classifier_forward.1} parent=0 // pred_region
    _
  $region33: #{classifier_forward.1} parent=0 // pred_fallthru
    _
  // Predicated region
  $region34: #{classifier_forward.1} parent=0 // pred_check
    _
  $region35: #{classifier_forward.1} parent=0 // pred_check_branch
    %1806 = sbr.rel (0) target = $region37
  $region36: #{classifier_forward.1} parent=0 // pred_region
    _
  $region37: #{classifier_forward.1} parent=0 // pred_fallthru
    _

</llo_original>
